<compile_context>
chip_gen: v7x
topology: tpu7x:2x2x1
jax: 0.10.0
libtpu: 0.0.40
codegen_flags: <defaults>
</compile_context>

<pallas_src>
import jax
import jax.numpy as jnp
from jax.experimental import pallas as pl
from jax.experimental.pallas import tpu as pltpu


def _round_up(a: int, m: int) -> int:
    return ((a + m - 1) // m) * m


def _cdiv(a: int, b: int) -> int:
    return (a + b - 1) // b


_MAX_ROW_TILE = 4096  # matmul rows per grid step for large problems


def _location_matmul_kernel(x_ref, w_ref, out_ref):
    # x_ref  : (row_tile, C_mat)  im2col rows for this tile
    # w_ref  : (C_mat, D_mat)     folded conv+dense weight (resident)
    # out_ref: (row_tile, D_mat)
    out_ref[...] = jnp.dot(
        x_ref[...], w_ref[...], preferred_element_type=jnp.float32
    ).astype(out_ref.dtype)


def _location_layer_forward(x, w_conv, w_dense):
    """
    x       : (B, 2, T)  — attention_weights_cat (NCW like PyTorch)
    w_conv  : (F, 2, K)  — Conv1d weight, PyTorch layout (out, in, k)
    w_dense : (D, F)     — Linear weight, PyTorch layout (out, in)
    returns : (B, T, D)
    """
    B, C, T = x.shape
    assert C == 2, "LocationLayer expects 2 input channels"
    F_, _, K = w_conv.shape
    D, _ = w_dense.shape
    pad = (K - 1) // 2
    dtype = x.dtype

    C_in = 2 * K          # im2col contraction width, column j = 2*k + c
    N = B * T             # logical output rows

    # ---- Output-lane packing decision ---------------------------------------
    if D % 128 == 0:
        g, D_lane = 1, D                       # already lane-dense
    elif 128 % D == 0:
        g, D_lane = 128 // D, D                # pack g rows/group -> 128 lanes
    else:
        g, D_lane = 1, _round_up(D, 128)       # fallback: pad + slice epilogue
        # TODO(synk): attention_dim not dividing/divided by 128 writes
        # D_lane/D x extra output bytes; only hit for unusual configs.

    # ---- Row tiling over matmul rows M = ceil(N / g) -------------------------
    M = _cdiv(N, g)
    if M <= _MAX_ROW_TILE:
        num_tiles, row_tile, M_pad = 1, M, M   # one fat step; no extra 0.35us
    else:                                      # steps on single-TC chips
        num_tiles = _cdiv(M, _MAX_ROW_TILE)
        if num_tiles % 2:
            num_tiles += 1                     # even split for v7x's two TCs
        row_tile = _round_up(_cdiv(M, num_tiles), 8)
        M_pad = num_tiles * row_tile

    # ---- im2col, channels-last (fused by XLA into one producer pass) ---------
    x_cl = jnp.transpose(x, (0, 2, 1))                          # (B, T, 2), tiny
    x_cl = jnp.pad(x_cl, ((0, 0), (pad, pad), (0, 0)))          # (B, T+2p, 2)
    cols = jnp.concatenate([x_cl[:, k:k + T, :] for k in range(K)], axis=-1)
    X = cols.reshape(N, C_in)                                   # (N, 2K), j=2k+c

    total_rows = M_pad * g
    if total_rows != N:
        X = jnp.pad(X, ((0, total_rows - N), (0, 0)))
    X_mat = X.reshape(M_pad, g * C_in)                          # metadata reshape

    C_raw = g * C_in
    C_mat = _round_up(C_raw, 8)
    if C_mat != C_raw:
        X_mat = jnp.pad(X_mat, ((0, 0), (0, C_mat - C_raw)))

    # ---- Fold conv into dense (tiny, offline) ---------------------------------
    w_kcf = jnp.transpose(w_conv, (2, 1, 0)).reshape(C_in, F_)  # row j = 2k + c
    w_eff = jnp.dot(w_kcf.astype(dtype), w_dense.T.astype(dtype))  # (2K, D)
    if D_lane != D:
        w_eff = jnp.pad(w_eff, ((0, 0), (0, D_lane - D)))
    if g > 1:
        w_mat = jnp.kron(jnp.eye(g, dtype=dtype), w_eff)        # block-diagonal
    else:
        w_mat = w_eff
    if C_mat != C_raw:
        w_mat = jnp.pad(w_mat, ((0, C_mat - C_raw), (0, 0)))
    D_mat = g * D_lane

    # ---- One lane-dense matmul on the MXU -------------------------------------
    out_mat = pl.pallas_call(
        _location_matmul_kernel,
        out_shape=jax.ShapeDtypeStruct((M_pad, D_mat), dtype),
        grid=(num_tiles,),
        in_specs=[
            pl.BlockSpec((row_tile, C_mat), lambda i: (i, 0)),
            pl.BlockSpec((C_mat, D_mat), lambda i: (0, 0)),      # resident weight
        ],
        out_specs=pl.BlockSpec((row_tile, D_mat), lambda i: (i, 0)),
        compiler_params=pltpu.CompilerParams(
            dimension_semantics=("parallel",),
        ),
        cost_estimate=pl.CostEstimate(
            flops=2 * M_pad * C_mat * D_mat,
            transcendentals=0,
            bytes_accessed=4 * (M_pad * C_mat + C_mat * D_mat + M_pad * D_mat),
        ),
    )(X_mat, w_mat)

    # ---- Epilogue: pure metadata when shapes already line up ------------------
    out_rows = out_mat.reshape(M_pad * g, D_lane)
    if M_pad * g != N:
        out_rows = out_rows[:N]
    if D_lane != D:
        out_rows = out_rows[:, :D]
    return out_rows.reshape(B, T, D)


location_layer_forward = jax.jit(_location_layer_forward)


def _reference_forward(x, w_conv, w_dense):
    """Pure-JAX reference mirroring the PyTorch module."""
    K = w_conv.shape[2]
    pad = (K - 1) // 2
    y = jax.lax.conv_general_dilated(
        x, w_conv,
        window_strides=(1,),
        padding=[(pad, pad)],
        dimension_numbers=("NCH", "OIH", "NCH"),
    )                                          # (B, F, T)
    y = jnp.transpose(y, (0, 2, 1))            # (B, T, F)
    return jnp.einsum("btf,df->btd", y, w_dense)


if __name__ == "__main__":
    key = jax.random.PRNGKey(0)

    # Config 1: small attention_dim=16 (exercises the row-group lane packing).
    B, T = 2, 16
    n_filters, kernel_size, attention_dim = 8, 5, 16
    k_x, k_conv, k_dense, key = jax.random.split(key, 4)
    x = jax.random.normal(k_x, (B, 2, T), dtype=jnp.float32)
    w_conv = 0.1 * jax.random.normal(
        k_conv, (n_filters, 2, kernel_size), dtype=jnp.float32)
    w_dense = 0.1 * jax.random.normal(
        k_dense, (attention_dim, n_filters), dtype=jnp.float32)

    out = jax.block_until_ready(location_layer_forward(x, w_conv, w_dense))
    ref = jax.block_until_ready(_reference_forward(x, w_conv, w_dense))
    assert out.shape == (B, T, attention_dim)
    assert jnp.allclose(out, ref, atol=1e-5, rtol=1e-5), "mismatch (D=16 path)"

    # Config 2: real Tacotron2 attention_dim=128 (lane-dense, no packing).
    B2, T2 = 2, 24
    n_f2, ks2, ad2 = 32, 31, 128
    k_x2, k_c2, k_d2, key = jax.random.split(key, 4)
    x2 = jax.random.normal(k_x2, (B2, 2, T2), dtype=jnp.float32)
    w_c2 = 0.05 * jax.random.normal(k_c2, (n_f2, 2, ks2), dtype=jnp.float32)
    w_d2 = 0.05 * jax.random.normal(k_d2, (ad2, n_f2), dtype=jnp.float32)

    out2 = jax.block_until_ready(location_layer_forward(x2, w_c2, w_d2))
    ref2 = jax.block_until_ready(_reference_forward(x2, w_c2, w_d2))
    assert out2.shape == (B2, T2, ad2)
    assert jnp.allclose(out2, ref2, atol=1e-5, rtol=1e-5), "mismatch (D=128 path)"

    print("KERNEL_OK")
</pallas_src>

<mosaic_0001>
module attributes {stable_mosaic.version = 11 : i64} {
  func.func @_location_matmul_kernel(%arg0: i32, %arg1: memref<4x80xf32, #tpu.memory_space<vmem>>, %arg2: memref<80x128xf32, #tpu.memory_space<vmem>>, %arg3: memref<4x128xf32, #tpu.memory_space<vmem>>) attributes {dimension_semantics = [#tpu.dimension_semantics<parallel>], iteration_bounds = array<i64: 1>, scalar_prefetch = 0 : i64, scratch_operands = 0 : i64, tpu.core_type = #tpu.core_type<tc>, window_params = [{transform_indices = @transform_0, window_bounds = array<i64: 4, 80>}, {pipeline_mode = #tpu.pipeline_mode<synchronous>, transform_indices = @transform_1, window_bounds = array<i64: 80, 128>}, {transform_indices = @transform_2, window_bounds = array<i64: 4, 128>}]} {
    %c0 = arith.constant 0 : index
    %c0_0 = arith.constant 0 : index
    %0 = vector.load %arg1[%c0, %c0_0] : memref<4x80xf32, #tpu.memory_space<vmem>>, vector<4x80xf32>
    %c0_1 = arith.constant 0 : index
    %c0_2 = arith.constant 0 : index
    %1 = vector.load %arg2[%c0_1, %c0_2] : memref<80x128xf32, #tpu.memory_space<vmem>>, vector<80x128xf32>
    %cst = arith.constant dense<0.000000e+00> : vector<4x128xf32>
    %2 = tpu.matmul %0, %1, %cst {dimension_numbers = #tpu.dot_dimension_numbers<[1], [0], [0], [1], [0, 0, 1, 1], [], []>} : vector<4x80xf32>, vector<80x128xf32>, vector<4x128xf32> -> vector<4x128xf32>
    %c0_3 = arith.constant 0 : index
    %c0_4 = arith.constant 0 : index
    %3 = vector.load %arg3[%c0_3, %c0_4] : memref<4x128xf32, #tpu.memory_space<vmem>>, vector<4x128xf32>
    tpu.vector_store %arg3[%c0_3, %c0_4], %2 {strides = array<i32>} : memref<4x128xf32, #tpu.memory_space<vmem>>, vector<4x128xf32>,
    return
  }
  func.func @transform_0(%arg0: i32) -> (i32, i32) {
    %c0_i32 = arith.constant 0 : i32
    %c0_i32_0 = arith.constant 0 : i32
    return %arg0, %c0_i32 : i32, i32
  }
  func.func @transform_1(%arg0: i32) -> (i32, i32) {
    %c0_i32 = arith.constant 0 : i32
    %c0_i32_0 = arith.constant 0 : i32
    %c0_i32_1 = arith.constant 0 : i32
    return %c0_i32, %c0_i32_0 : i32, i32
  }
  func.func @transform_2(%arg0: i32) -> (i32, i32) {
    %c0_i32 = arith.constant 0 : i32
    %c0_i32_0 = arith.constant 0 : i32
    return %arg0, %c0_i32 : i32, i32
  }
}

</mosaic_0001>

<llo_original>
// kernel: _location_layer_forward.1
$region0: #{_location_layer_forward.1}
  #allocation0 [shape = 'u32[]', space=smem, size = 0x4, offset = 0x4, fixed_abs, tag = 'smem constant byte address 0x4 - core index']
  #allocation1 [shape = 'u32[144,128]{1,0:T(1,128)}', space=vmem, size = 0x12000, scoped, tag = 'internal scratch']
  %s0 = inlined_call_operand.vmem [shape: f32[4,80], index: 0, kind: input, shape index: {}]
  %s1 = inlined_call_operand.vmem [shape: f32[80,128], index: 1, kind: input, shape index: {}]
  %s2 = inlined_call_operand.vmem [shape: f32[4,128], index: 2, kind: output, shape index: {}]
  %s3 = sld [smem:[#allocation0]]
  $region18: #{_location_layer_forward.1} parent=0
    _
  %s5 = ssub.s32 1, %s3
  %s6 = scalar_select 0, %s5, %s3
  // Predicated region
  $region2: #{_location_layer_forward.1} parent=0 // pred_check
    _
  $region3: #{_location_layer_forward.1} parent=0 // pred_check_branch
    %8 = sbr.rel (0) target = $region5
  $region4: #{_location_layer_forward.1} parent=0 // pred_region
    _
  $region5: #{_location_layer_forward.1} parent=0 // pred_fallthru
    _
  // Predicated region
  $region6: #{_location_layer_forward.1} parent=0 // pred_check
    _
  $region7: #{_location_layer_forward.1} parent=0 // pred_check_branch
    %10 = sbr.rel (0) target = $region9
  $region8: #{_location_layer_forward.1} parent=0 // pred_region
    _
  $region9: #{_location_layer_forward.1} parent=0 // pred_fallthru
    _
  %v11 = vld [vmem:[%s0] sm:$0xf]
  %v12 = vld [vmem:[%s1] sm:$0xff]
  %v13 = vld [vmem:[%s1 + $0x8] sm:$0xff]
  %v14 = vld [vmem:[%s1 + $0x10] sm:$0xff]
  %v15 = vld [vmem:[%s1 + $0x18] sm:$0xff]
  %v16 = vld [vmem:[%s1 + $0x20] sm:$0xff]
  %v17 = vld [vmem:[%s1 + $0x28] sm:$0xff]
  %v18 = vld [vmem:[%s1 + $0x30] sm:$0xff]
  %v19 = vld [vmem:[%s1 + $0x38] sm:$0xff]
  %v20 = vld [vmem:[%s1 + $0x40] sm:$0xff]
  %v21 = vld [vmem:[%s1 + $0x48] sm:$0xff]
  %vm22 = vcmask 654336
  %v24 = vsel %vm22, %v11, 0
  %26 = vmatprep.subr.mxu0 0.0
  %27 = vmatpush1.msra.mxu0 %v12
  %28 = vmatprep.subr.mxu0 0.0
  %29 = vmatpush1.msra.mxu0 %v13
  %30 = vmatprep.subr.mxu0 0.0
  %31 = vmatpush1.msra.mxu0 %v14
  %32 = vmatprep.subr.mxu0 0.0
  %33 = vmatpush1.msra.mxu0 %v15
  %34 = vmatprep.subr.mxu0 0.0
  %35 = vmatpush1.msra.mxu0 %v16
  %36 = vmatprep.subr.mxu0 0.0
  %37 = vmatpush1.msra.mxu0 %v17
  %38 = vmatprep.subr.mxu0 0.0
  %39 = vmatpush1.msra.mxu0 %v18
  %40 = vmatprep.subr.mxu0 0.0
  %41 = vmatpush1.msra.mxu0 %v19
  %42 = vmatprep.subr.mxu0 0.0
  %43 = vmatpush1.msra.mxu0 %v20
  %44 = vmatprep.subr.mxu0 0.0
  %45 = vmatpush1.msra.mxu0 %v21
  %46 = vmatprep.subr.mxu0 0.0
  %47 = vmatpush1.msra.mxu0 0.0
  %48 = vmatprep.subr.mxu0 0.0
  %49 = vmatpush1.msra.mxu0 0.0
  %50 = vmatprep.subr.mxu0 0.0
  %51 = vmatpush1.msra.mxu0 0.0
  %52 = vmatprep.subr.mxu0 0.0
  %53 = vmatpush1.msra.mxu0 0.0
  %54 = vmatprep.subr.mxu0 0.0
  %55 = vmatpush1.msra.mxu0 0.0
  %56 = vmatprep.subr.mxu0 0.0
  %57 = vmatpush1.msra.mxu0 0.0
  %58 = vmatprep.subr.mxu0 0.0
  %59 = vmatpush1.msra.mxu0 0.0
  %60 = vmatprep.subr.mxu0 0.0
  %61 = vmatpush1.msra.mxu0 0.0
  %62 = vmatprep.subr.mxu0 0.0
  %63 = vmatpush1.msra.mxu0 0.0
  %64 = vmatprep.subr.mxu0 0.0
  %65 = vmatpush1.msra.mxu0 0.0
  %66 = vmatprep.subr.mxu0 0.0
  %67 = vmatpush1.msra.mxu0 0.0
  %68 = vmatprep.subr.mxu0 0.0
  %69 = vmatpush1.msra.mxu0 0.0
  %70 = vmatprep.subr.mxu0 0.0
  %71 = vmatpush1.msra.mxu0 0.0
  %72 = vmatprep.subr.mxu0 0.0
  %73 = vmatpush1.msra.mxu0 0.0
  %74 = vmatprep.subr.mxu0 0.0
  %75 = vmatpush1.msra.mxu0 0.0
  %76 = vmatprep.subr.mxu0 0.0
  %77 = vmatpush1.msra.mxu0 0.0
  %78 = vmatprep.subr.mxu0 0.0
  %79 = vmatpush1.msra.mxu0 0.0
  %80 = vmatprep.subr.mxu0 0.0
  %81 = vmatpush1.msra.mxu0 0.0
  %82 = vmatprep.subr.mxu0 0.0
  %83 = vmatpush1.msra.mxu0 0.0
  %84 = vmatprep.subr.mxu0 0.0
  %85 = vmatpush1.msra.mxu0 0.0
  %86 = vmatprep.subr.mxu0 0.0
  %87 = vmatpush1.msra.mxu0 0.0
  %88 = vmatprep.subr.mxu0 0.0
  %89 = vmatpush1.msra.mxu0 0.0
  %90 = vmatprep.mubr.f32.mxu0 0.0
  %91 = vmatmul.mubr.f32.gmra.mrb[0].mxu0 %v24
  %v92 = vpop.f32.mrb[0].mxu0
  %v93 = vadd.f32 0.0, %v92
  %v94 = vpop.f32.mrb[0].mxu0
  %95 = vdwg.mxu0
  %96 = vst [vmem:[%s2] sm:$0xf] %v93
  // Predicated region
  $region10: #{_location_layer_forward.1} parent=0 // pred_check
    _
  $region11: #{_location_layer_forward.1} parent=0 // pred_check_branch
    %98 = sbr.rel (0) target = $region13
  $region12: #{_location_layer_forward.1} parent=0 // pred_region
    _
  $region13: #{_location_layer_forward.1} parent=0 // pred_fallthru
    _
  // Predicated region
  $region14: #{_location_layer_forward.1} parent=0 // pred_check
    _
  $region15: #{_location_layer_forward.1} parent=0 // pred_check_branch
    %100 = sbr.rel (0) target = $region17
  $region16: #{_location_layer_forward.1} parent=0 // pred_region
    _
  $region17: #{_location_layer_forward.1} parent=0 // pred_fallthru
    _

</llo_original>
